<compile_context>
chip_gen: v6e
topology: v6e:2x2x1
jax: 0.10.0
libtpu: 0.0.40
codegen_flags: <defaults>
</compile_context>

<pallas_src>
import functools

import jax
import jax.numpy as jnp
from jax.experimental import pallas as pl
from jax.experimental.pallas import tpu as pltpu


_HALF_LOG_TWO_PI = 0.9189385332046727  # 0.5 * log(2*pi)


def _approx_recip(w):
    """1/w via EUP approximate reciprocal + one Newton-Raphson step (VPU FMAs)."""
    r = pl.reciprocal(w, approx=True)
    return r * (2.0 - w * r)


def _lgamma_pos(z):
    """log(Gamma(z)) for z > 0 (f32), VPU/EUP only.

    Shift-by-5 recurrence + Stirling series:
        lgamma(z) = lgamma(z+5) - log(z*(z+1)*(z+2)*(z+3)*(z+4))
    Cost: 2 logs + 1 approximate reciprocal per call (vs 8 exact divides +
    2 logs for the partial-fraction Lanczos).  Absolute error < ~1e-6 for
    0 < z < ~5e7 (above that the z**5 product overflows f32 — far beyond the
    count / dispersion ranges this loss sees).
    """
    p = z * (z + 1.0) * (z + 2.0) * (z + 3.0) * (z + 4.0)
    w = z + 5.0
    r = _approx_recip(w)
    r2 = r * r
    corr = r * (1.0 / 12.0 - r2 * (1.0 / 360.0 - r2 * (1.0 / 1260.0)))
    return (w - 0.5) * jnp.log(w) - w + _HALF_LOG_TWO_PI + corr - jnp.log(p)


def _zinb_kernel(x_ref, mean_ref, disp_ref, pi_ref, sf_ref, out_ref, *,
                 batch, tb, ridge_lambda, need_mask):
    eps = 1e-10

    x = x_ref[...].astype(jnp.float32)
    mu = mean_ref[...].astype(jnp.float32)
    disp = disp_ref[...].astype(jnp.float32)
    pi = pi_ref[...].astype(jnp.float32)
    sf = sf_ref[...].astype(jnp.float32)           # (tb, 1) -> lane broadcast

    mean = mu * sf                                  # mean * scale_factor

    # Shared logs (each used at least twice below).
    ld = jnp.log(disp + eps)                        # log(disp + eps)
    lm = jnp.log(mean + eps)                        # log(mean + eps)
    ldm = jnp.log(disp + mean + eps)                # log(disp + mean + eps)

    t1 = (_lgamma_pos(disp + eps) + _lgamma_pos(x + 1.0)
          - _lgamma_pos(x + disp + eps))
    # log(1 + mean/(disp+eps)) == ldm - ld   (no divide needed)
    t2 = (disp + x) * (ldm - ld) + x * (ld - lm)
    nb_case = t1 + t2 - jnp.log(1.0 - pi + eps)

    # (disp/(disp+mean+eps))**disp == exp(disp*(ld - ldm)).  Using
    # log(disp+eps) instead of log(disp) differs by O(eps/disp) and gives the
    # pow(0, 0) == 1 corner for disp == 0 exactly, matching torch.pow.
    zero_nb = jnp.exp(disp * (ld - ldm))
    zero_case = -jnp.log(pi + (1.0 - pi) * zero_nb + eps)

    res = jnp.where(x <= 1e-8, zero_case, nb_case)
    if ridge_lambda > 0.0:
        res = res + jnp.float32(ridge_lambda) * (pi * pi)

    # Lane (per-row) sums first, then mask the padded rows of a ragged last
    # tile on the cheap (tb, 1) row sums.  Padded rows are computed on
    # whatever the edge DMA left in VMEM and may be NaN/Inf; that stays
    # confined to their own row sum and is replaced by 0 here — do NOT
    # "optimize away" this select.
    row_sums = jnp.sum(res, axis=1, keepdims=True)            # (tb, 1)
    if need_mask:
        rows = jax.lax.broadcasted_iota(jnp.int32, row_sums.shape, 0)
        valid = (pl.program_id(0) * tb + rows) < batch
        row_sums = jnp.where(valid, row_sums, 0.0)

    # Per-block partial sum; the final sum / (B*G) happens in the wrapper.
    out_ref[...] = jnp.zeros(out_ref.shape, out_ref.dtype) + jnp.sum(row_sums)


def _round_up(n, m):
    return ((n + m - 1) // m) * m


def zinb_loss(x, mean, disp, pi, scale_factor, *, ridge_lambda=0.0, tb=None):
    """Pallas implementation of ZINBLoss.forward(x, mean, disp, pi, scale_factor)."""
    assert x.ndim == 2 and x.shape == mean.shape == disp.shape == pi.shape
    B, G = x.shape

    sf = jnp.asarray(scale_factor, dtype=x.dtype)
    if sf.ndim == 0:
        sf = jnp.full((B, 1), sf, dtype=x.dtype)
    elif sf.ndim == 1:
        sf = sf.reshape(B, 1)
    assert sf.shape == (B, 1), "scale_factor must be scalar, (B,) or (B, 1)"
    # TODO(synk): a fully elementwise (B, G) scale_factor would need its own
    # (tb, G) BlockSpec; per-row size factors (the scAce usage) are handled here.

    if tb is None:
        # EUP-bound kernel: tiles beyond a few hundred rows buy nothing but a
        # bigger VMEM working set (pipeline buffers + f32 temporaries), which
        # matters on v7x (64 MiB per TensorCore).  Target ~2 MiB f32 per tile.
        tb = (2 * 1024 * 1024) // (G * 4)
        tb = max(8, (tb // 8) * 8)
        tb = min(tb, 512)
        # At least two row blocks so the "parallel" grid axis feeds both
        # TensorCores on v7x for small/medium batches (free on v5e/v6e).
        tb = min(tb, max(8, _round_up(-(-B // 2), 8)))
    assert tb % 8 == 0 and tb >= 8

    nblk = pl.cdiv(B, tb)
    need_mask = (B % tb) != 0

    # Double-buffered input blocks + elementwise f32 temporaries + slack,
    # floored at the scoped default and capped v7x-safe.
    pipeline_bytes = 2 * (4 * tb * G * x.dtype.itemsize + tb * sf.dtype.itemsize)
    scratch_bytes = 16 * tb * G * 4
    vmem_limit = pipeline_bytes + scratch_bytes + (4 << 20)
    vmem_limit = min(max(vmem_limit, 32 << 20), 48 << 20)

    kernel = functools.partial(
        _zinb_kernel, batch=B, tb=tb,
        ridge_lambda=float(ridge_lambda), need_mask=need_mask)

    big = pl.BlockSpec((tb, G), lambda i: (i, 0))
    partials = pl.pallas_call(
        kernel,
        out_shape=jax.ShapeDtypeStruct((nblk, 1, 1), jnp.float32),
        grid_spec=pltpu.PrefetchScalarGridSpec(
            num_scalar_prefetch=0,
            grid=(nblk,),
            in_specs=[big, big, big, big,
                      pl.BlockSpec((tb, 1), lambda i: (i, 0))],
            out_specs=pl.BlockSpec((1, 1, 1), lambda i: (i, 0, 0)),
        ),
        compiler_params=pltpu.CompilerParams(
            # Independent per-block partials -> parallel axis (both TCs on v7x).
            dimension_semantics=("parallel",),
            vmem_limit_bytes=int(vmem_limit),
        ),
    )(x, mean, disp, pi, sf)

    return jnp.sum(partials) / jnp.float32(B * G)


def zinb_loss_reference(x, mean, disp, pi, scale_factor, ridge_lambda=0.0):
    """Pure-JAX reference matching the PyTorch module."""
    eps = 1e-10
    mean = mean * scale_factor
    t1 = (jax.lax.lgamma(disp + eps) + jax.lax.lgamma(x + 1.0)
          - jax.lax.lgamma(x + disp + eps))
    t2 = ((disp + x) * jnp.log(1.0 + mean / (disp + eps))
          + x * (jnp.log(disp + eps) - jnp.log(mean + eps)))
    nb_case = t1 + t2 - jnp.log(1.0 - pi + eps)
    zero_nb = jnp.power(disp / (disp + mean + eps), disp)
    zero_case = -jnp.log(pi + (1.0 - pi) * zero_nb + eps)
    result = jnp.where(x <= 1e-8, zero_case, nb_case)
    if ridge_lambda > 0:
        result = result + ridge_lambda * jnp.square(pi)
    return jnp.mean(result)


if __name__ == "__main__":
    key = jax.random.PRNGKey(0)
    k1, k2, k3, k4, k5 = jax.random.split(key, 5)

    B, G = 32, 256  # small (cells, genes) shapes; G is the lane axis
    x = jax.random.poisson(k1, 2.0, (B, G)).astype(jnp.float32)       # counts (has zeros)
    mean = jnp.exp(0.3 * jax.random.normal(k2, (B, G))).astype(jnp.float32)
    disp = jnp.exp(0.3 * jax.random.normal(k3, (B, G))).astype(jnp.float32)
    pi = jax.nn.sigmoid(jax.random.normal(k4, (B, G))).astype(jnp.float32)
    sf = jax.random.uniform(k5, (B, 1), minval=0.5, maxval=1.5).astype(jnp.float32)

    # Default module config (ridge_lambda = 0); two grid blocks (tb = 16).
    out = zinb_loss(x, mean, disp, pi, sf)
    out = jax.block_until_ready(out)
    ref = zinb_loss_reference(x, mean, disp, pi, sf)
    assert jnp.allclose(out, ref, rtol=1e-3, atol=1e-3), (out, ref)

    # Ridge term + ragged batch (B not a multiple of the row tile -> mask path).
    B2 = 30
    out2 = zinb_loss(x[:B2], mean[:B2], disp[:B2], pi[:B2], sf[:B2],
                     ridge_lambda=0.5)
    out2 = jax.block_until_ready(out2)
    ref2 = zinb_loss_reference(x[:B2], mean[:B2], disp[:B2], pi[:B2], sf[:B2],
                               ridge_lambda=0.5)
    assert jnp.allclose(out2, ref2, rtol=1e-3, atol=1e-3), (out2, ref2)

    print("KERNEL_OK")
</pallas_src>

<mosaic_0001>
module attributes {stable_mosaic.version = 11 : i64} {
  func.func @_zinb_kernel(%arg0: i32, %arg1: memref<16x256xf32, #tpu.memory_space<vmem>>, %arg2: memref<16x256xf32, #tpu.memory_space<vmem>>, %arg3: memref<16x256xf32, #tpu.memory_space<vmem>>, %arg4: memref<16x256xf32, #tpu.memory_space<vmem>>, %arg5: memref<16x1xf32, #tpu.memory_space<vmem>>, %arg6: memref<1x1x1xf32, #tpu.memory_space<vmem>>) attributes {dimension_semantics = [#tpu.dimension_semantics<parallel>], iteration_bounds = array<i64: 2>, scalar_prefetch = 0 : i64, scratch_operands = 0 : i64, tpu.core_type = #tpu.core_type<tc>, window_params = [{transform_indices = @transform_0, window_bounds = array<i64: 16, 256>}, {transform_indices = @transform_1, window_bounds = array<i64: 16, 256>}, {transform_indices = @transform_2, window_bounds = array<i64: 16, 256>}, {transform_indices = @transform_3, window_bounds = array<i64: 16, 256>}, {transform_indices = @transform_4, window_bounds = array<i64: 16, 1>}, {transform_indices = @transform_5, window_bounds = array<i64: 1, 1, 1>}]} {
    %c0 = arith.constant 0 : index
    %c0_0 = arith.constant 0 : index
    %0 = vector.load %arg1[%c0, %c0_0] : memref<16x256xf32, #tpu.memory_space<vmem>>, vector<16x256xf32>
    %c0_1 = arith.constant 0 : index
    %c0_2 = arith.constant 0 : index
    %1 = vector.load %arg2[%c0_1, %c0_2] : memref<16x256xf32, #tpu.memory_space<vmem>>, vector<16x256xf32>
    %c0_3 = arith.constant 0 : index
    %c0_4 = arith.constant 0 : index
    %2 = vector.load %arg3[%c0_3, %c0_4] : memref<16x256xf32, #tpu.memory_space<vmem>>, vector<16x256xf32>
    %c0_5 = arith.constant 0 : index
    %c0_6 = arith.constant 0 : index
    %3 = vector.load %arg4[%c0_5, %c0_6] : memref<16x256xf32, #tpu.memory_space<vmem>>, vector<16x256xf32>
    %c0_7 = arith.constant 0 : index
    %c0_8 = arith.constant 0 : index
    %4 = vector.load %arg5[%c0_7, %c0_8] : memref<16x1xf32, #tpu.memory_space<vmem>>, vector<16x1xf32>
    %5 = vector.broadcast %4 : vector<16x1xf32> to vector<16x256xf32>
    %6 = arith.mulf %1, %5 : vector<16x256xf32>
    %cst = arith.constant 1.000000e-10 : f32
    %7 = vector.broadcast %cst : f32 to vector<16x256xf32>
    %8 = arith.addf %2, %7 : vector<16x256xf32>
    %9 = math.log %8 : vector<16x256xf32>
    %cst_9 = arith.constant 1.000000e-10 : f32
    %10 = vector.broadcast %cst_9 : f32 to vector<16x256xf32>
    %11 = arith.addf %6, %10 : vector<16x256xf32>
    %12 = math.log %11 : vector<16x256xf32>
    %13 = arith.addf %2, %6 : vector<16x256xf32>
    %cst_10 = arith.constant 1.000000e-10 : f32
    %14 = vector.broadcast %cst_10 : f32 to vector<16x256xf32>
    %15 = arith.addf %13, %14 : vector<16x256xf32>
    %16 = math.log %15 : vector<16x256xf32>
    %cst_11 = arith.constant 1.000000e-10 : f32
    %17 = vector.broadcast %cst_11 : f32 to vector<16x256xf32>
    %18 = arith.addf %2, %17 : vector<16x256xf32>
    %cst_12 = arith.constant 1.000000e+00 : f32
    %19 = vector.broadcast %cst_12 : f32 to vector<16x256xf32>
    %20 = arith.addf %18, %19 : vector<16x256xf32>
    %21 = arith.mulf %18, %20 : vector<16x256xf32>
    %cst_13 = arith.constant 2.000000e+00 : f32
    %22 = vector.broadcast %cst_13 : f32 to vector<16x256xf32>
    %23 = arith.addf %18, %22 : vector<16x256xf32>
    %24 = arith.mulf %21, %23 : vector<16x256xf32>
    %cst_14 = arith.constant 3.000000e+00 : f32
    %25 = vector.broadcast %cst_14 : f32 to vector<16x256xf32>
    %26 = arith.addf %18, %25 : vector<16x256xf32>
    %27 = arith.mulf %24, %26 : vector<16x256xf32>
    %cst_15 = arith.constant 4.000000e+00 : f32
    %28 = vector.broadcast %cst_15 : f32 to vector<16x256xf32>
    %29 = arith.addf %18, %28 : vector<16x256xf32>
    %30 = arith.mulf %27, %29 : vector<16x256xf32>
    %cst_16 = arith.constant 5.000000e+00 : f32
    %31 = vector.broadcast %cst_16 : f32 to vector<16x256xf32>
    %32 = arith.addf %18, %31 : vector<16x256xf32>
    %33 = tpu.reciprocal %32 {approx = true} : vector<16x256xf32> -> vector<16x256xf32>
    %34 = arith.mulf %32, %33 : vector<16x256xf32>
    %cst_17 = arith.constant 2.000000e+00 : f32
    %35 = vector.broadcast %cst_17 : f32 to vector<16x256xf32>
    %36 = arith.subf %35, %34 : vector<16x256xf32>
    %37 = arith.mulf %33, %36 : vector<16x256xf32>
    %38 = arith.mulf %37, %37 : vector<16x256xf32>
    %cst_18 = arith.constant 7.93650805E-4 : f32
    %39 = vector.broadcast %cst_18 : f32 to vector<16x256xf32>
    %40 = arith.mulf %38, %39 : vector<16x256xf32>
    %cst_19 = arith.constant 0.00277777785 : f32
    %41 = vector.broadcast %cst_19 : f32 to vector<16x256xf32>
    %42 = arith.subf %41, %40 : vector<16x256xf32>
    %43 = arith.mulf %38, %42 : vector<16x256xf32>
    %cst_20 = arith.constant 0.0833333358 : f32
    %44 = vector.broadcast %cst_20 : f32 to vector<16x256xf32>
    %45 = arith.subf %44, %43 : vector<16x256xf32>
    %46 = arith.mulf %37, %45 : vector<16x256xf32>
    %cst_21 = arith.constant 5.000000e-01 : f32
    %47 = vector.broadcast %cst_21 : f32 to vector<16x256xf32>
    %48 = arith.subf %32, %47 : vector<16x256xf32>
    %49 = math.log %32 : vector<16x256xf32>
    %50 = arith.mulf %48, %49 : vector<16x256xf32>
    %51 = arith.subf %50, %32 : vector<16x256xf32>
    %cst_22 = arith.constant 0.918938517 : f32
    %52 = vector.broadcast %cst_22 : f32 to vector<16x256xf32>
    %53 = arith.addf %51, %52 : vector<16x256xf32>
    %54 = arith.addf %53, %46 : vector<16x256xf32>
    %55 = math.log %30 : vector<16x256xf32>
    %56 = arith.subf %54, %55 : vector<16x256xf32>
    %cst_23 = arith.constant 1.000000e+00 : f32
    %57 = vector.broadcast %cst_23 : f32 to vector<16x256xf32>
    %58 = arith.addf %0, %57 : vector<16x256xf32>
    %cst_24 = arith.constant 1.000000e+00 : f32
    %59 = vector.broadcast %cst_24 : f32 to vector<16x256xf32>
    %60 = arith.addf %58, %59 : vector<16x256xf32>
    %61 = arith.mulf %58, %60 : vector<16x256xf32>
    %cst_25 = arith.constant 2.000000e+00 : f32
    %62 = vector.broadcast %cst_25 : f32 to vector<16x256xf32>
    %63 = arith.addf %58, %62 : vector<16x256xf32>
    %64 = arith.mulf %61, %63 : vector<16x256xf32>
    %cst_26 = arith.constant 3.000000e+00 : f32
    %65 = vector.broadcast %cst_26 : f32 to vector<16x256xf32>
    %66 = arith.addf %58, %65 : vector<16x256xf32>
    %67 = arith.mulf %64, %66 : vector<16x256xf32>
    %cst_27 = arith.constant 4.000000e+00 : f32
    %68 = vector.broadcast %cst_27 : f32 to vector<16x256xf32>
    %69 = arith.addf %58, %68 : vector<16x256xf32>
    %70 = arith.mulf %67, %69 : vector<16x256xf32>
    %cst_28 = arith.constant 5.000000e+00 : f32
    %71 = vector.broadcast %cst_28 : f32 to vector<16x256xf32>
    %72 = arith.addf %58, %71 : vector<16x256xf32>
    %73 = tpu.reciprocal %72 {approx = true} : vector<16x256xf32> -> vector<16x256xf32>
    %74 = arith.mulf %72, %73 : vector<16x256xf32>
    %cst_29 = arith.constant 2.000000e+00 : f32
    %75 = vector.broadcast %cst_29 : f32 to vector<16x256xf32>
    %76 = arith.subf %75, %74 : vector<16x256xf32>
    %77 = arith.mulf %73, %76 : vector<16x256xf32>
    %78 = arith.mulf %77, %77 : vector<16x256xf32>
    %cst_30 = arith.constant 7.93650805E-4 : f32
    %79 = vector.broadcast %cst_30 : f32 to vector<16x256xf32>
    %80 = arith.mulf %78, %79 : vector<16x256xf32>
    %cst_31 = arith.constant 0.00277777785 : f32
    %81 = vector.broadcast %cst_31 : f32 to vector<16x256xf32>
    %82 = arith.subf %81, %80 : vector<16x256xf32>
    %83 = arith.mulf %78, %82 : vector<16x256xf32>
    %cst_32 = arith.constant 0.0833333358 : f32
    %84 = vector.broadcast %cst_32 : f32 to vector<16x256xf32>
    %85 = arith.subf %84, %83 : vector<16x256xf32>
    %86 = arith.mulf %77, %85 : vector<16x256xf32>
    %cst_33 = arith.constant 5.000000e-01 : f32
    %87 = vector.broadcast %cst_33 : f32 to vector<16x256xf32>
    %88 = arith.subf %72, %87 : vector<16x256xf32>
    %89 = math.log %72 : vector<16x256xf32>
    %90 = arith.mulf %88, %89 : vector<16x256xf32>
    %91 = arith.subf %90, %72 : vector<16x256xf32>
    %cst_34 = arith.constant 0.918938517 : f32
    %92 = vector.broadcast %cst_34 : f32 to vector<16x256xf32>
    %93 = arith.addf %91, %92 : vector<16x256xf32>
    %94 = arith.addf %93, %86 : vector<16x256xf32>
    %95 = math.log %70 : vector<16x256xf32>
    %96 = arith.subf %94, %95 : vector<16x256xf32>
    %97 = arith.addf %56, %96 : vector<16x256xf32>
    %98 = arith.addf %0, %2 : vector<16x256xf32>
    %cst_35 = arith.constant 1.000000e-10 : f32
    %99 = vector.broadcast %cst_35 : f32 to vector<16x256xf32>
    %100 = arith.addf %98, %99 : vector<16x256xf32>
    %cst_36 = arith.constant 1.000000e+00 : f32
    %101 = vector.broadcast %cst_36 : f32 to vector<16x256xf32>
    %102 = arith.addf %100, %101 : vector<16x256xf32>
    %103 = arith.mulf %100, %102 : vector<16x256xf32>
    %cst_37 = arith.constant 2.000000e+00 : f32
    %104 = vector.broadcast %cst_37 : f32 to vector<16x256xf32>
    %105 = arith.addf %100, %104 : vector<16x256xf32>
    %106 = arith.mulf %103, %105 : vector<16x256xf32>
    %cst_38 = arith.constant 3.000000e+00 : f32
    %107 = vector.broadcast %cst_38 : f32 to vector<16x256xf32>
    %108 = arith.addf %100, %107 : vector<16x256xf32>
    %109 = arith.mulf %106, %108 : vector<16x256xf32>
    %cst_39 = arith.constant 4.000000e+00 : f32
    %110 = vector.broadcast %cst_39 : f32 to vector<16x256xf32>
    %111 = arith.addf %100, %110 : vector<16x256xf32>
    %112 = arith.mulf %109, %111 : vector<16x256xf32>
    %cst_40 = arith.constant 5.000000e+00 : f32
    %113 = vector.broadcast %cst_40 : f32 to vector<16x256xf32>
    %114 = arith.addf %100, %113 : vector<16x256xf32>
    %115 = tpu.reciprocal %114 {approx = true} : vector<16x256xf32> -> vector<16x256xf32>
    %116 = arith.mulf %114, %115 : vector<16x256xf32>
    %cst_41 = arith.constant 2.000000e+00 : f32
    %117 = vector.broadcast %cst_41 : f32 to vector<16x256xf32>
    %118 = arith.subf %117, %116 : vector<16x256xf32>
    %119 = arith.mulf %115, %118 : vector<16x256xf32>
    %120 = arith.mulf %119, %119 : vector<16x256xf32>
    %cst_42 = arith.constant 7.93650805E-4 : f32
    %121 = vector.broadcast %cst_42 : f32 to vector<16x256xf32>
    %122 = arith.mulf %120, %121 : vector<16x256xf32>
    %cst_43 = arith.constant 0.00277777785 : f32
    %123 = vector.broadcast %cst_43 : f32 to vector<16x256xf32>
    %124 = arith.subf %123, %122 : vector<16x256xf32>
    %125 = arith.mulf %120, %124 : vector<16x256xf32>
    %cst_44 = arith.constant 0.0833333358 : f32
    %126 = vector.broadcast %cst_44 : f32 to vector<16x256xf32>
    %127 = arith.subf %126, %125 : vector<16x256xf32>
    %128 = arith.mulf %119, %127 : vector<16x256xf32>
    %cst_45 = arith.constant 5.000000e-01 : f32
    %129 = vector.broadcast %cst_45 : f32 to vector<16x256xf32>
    %130 = arith.subf %114, %129 : vector<16x256xf32>
    %131 = math.log %114 : vector<16x256xf32>
    %132 = arith.mulf %130, %131 : vector<16x256xf32>
    %133 = arith.subf %132, %114 : vector<16x256xf32>
    %cst_46 = arith.constant 0.918938517 : f32
    %134 = vector.broadcast %cst_46 : f32 to vector<16x256xf32>
    %135 = arith.addf %133, %134 : vector<16x256xf32>
    %136 = arith.addf %135, %128 : vector<16x256xf32>
    %137 = math.log %112 : vector<16x256xf32>
    %138 = arith.subf %136, %137 : vector<16x256xf32>
    %139 = arith.subf %97, %138 : vector<16x256xf32>
    %140 = arith.addf %2, %0 : vector<16x256xf32>
    %141 = arith.subf %16, %9 : vector<16x256xf32>
    %142 = arith.mulf %140, %141 : vector<16x256xf32>
    %143 = arith.subf %9, %12 : vector<16x256xf32>
    %144 = arith.mulf %0, %143 : vector<16x256xf32>
    %145 = arith.addf %142, %144 : vector<16x256xf32>
    %146 = arith.addf %139, %145 : vector<16x256xf32>
    %cst_47 = arith.constant 1.000000e+00 : f32
    %147 = vector.broadcast %cst_47 : f32 to vector<16x256xf32>
    %148 = arith.subf %147, %3 : vector<16x256xf32>
    %cst_48 = arith.constant 1.000000e-10 : f32
    %149 = vector.broadcast %cst_48 : f32 to vector<16x256xf32>
    %150 = arith.addf %148, %149 : vector<16x256xf32>
    %151 = math.log %150 : vector<16x256xf32>
    %152 = arith.subf %146, %151 : vector<16x256xf32>
    %153 = arith.subf %9, %16 : vector<16x256xf32>
    %154 = arith.mulf %2, %153 : vector<16x256xf32>
    %155 = math.exp %154 : vector<16x256xf32>
    %cst_49 = arith.constant 1.000000e+00 : f32
    %156 = vector.broadcast %cst_49 : f32 to vector<16x256xf32>
    %157 = arith.subf %156, %3 : vector<16x256xf32>
    %158 = arith.mulf %157, %155 : vector<16x256xf32>
    %159 = arith.addf %3, %158 : vector<16x256xf32>
    %cst_50 = arith.constant 1.000000e-10 : f32
    %160 = vector.broadcast %cst_50 : f32 to vector<16x256xf32>
    %161 = arith.addf %159, %160 : vector<16x256xf32>
    %162 = math.log %161 : vector<16x256xf32>
    %cst_51 = arith.constant 0.000000e+00 : f32
    %163 = vector.broadcast %cst_51 : f32 to vector<16x256xf32>
    %164 = arith.subf %163, %162 : vector<16x256xf32>
    %cst_52 = arith.constant 9.99999993E-9 : f32
    %165 = vector.broadcast %cst_52 : f32 to vector<16x256xf32>
    %166 = arith.cmpf ole, %0, %165 : vector<16x256xf32>
    %167 = arith.select %166, %164, %152 : vector<16x256xi1>, vector<16x256xf32>
    %cst_53 = arith.constant dense<0.000000e+00> : vector<16xf32>
    %168 = vector.multi_reduction <add>, %167, %cst_53 [1] : vector<16x256xf32> to vector<16xf32>
    %169 = vector.shape_cast %168 : vector<16xf32> to vector<16x1xf32>
    %cst_54 = arith.constant 0.000000e+00 : f32
    %170 = vector.broadcast %cst_54 : f32 to vector<1x1x1xf32>
    %171 = vector.shape_cast %169 : vector<16x1xf32> to vector<1x16x1xf32>
    %cst_55 = arith.constant dense<0.000000e+00> : vector<1xf32>
    %172 = vector.multi_reduction <add>, %171, %cst_55 [1, 2] : vector<1x16x1xf32> to vector<1xf32>
    %173 = vector.shape_cast %172 : vector<1xf32> to vector<1x1x1xf32>
    %174 = vector.extract %173[0, 0, 0] : f32 from vector<1x1x1xf32>
    %175 = vector.broadcast %174 : f32 to vector<1x1x1xf32>
    %176 = arith.addf %170, %175 : vector<1x1x1xf32>
    %c0_56 = arith.constant 0 : index
    %c0_57 = arith.constant 0 : index
    %c0_58 = arith.constant 0 : index
    %177 = vector.load %arg6[%c0_56, %c0_57, %c0_58] : memref<1x1x1xf32, #tpu.memory_space<vmem>>, vector<1x1x1xf32>
    tpu.vector_store %arg6[%c0_56, %c0_57, %c0_58], %176 {strides = array<i32>} : memref<1x1x1xf32, #tpu.memory_space<vmem>>, vector<1x1x1xf32>,
    return
  }
  func.func @transform_0(%arg0: i32) -> (i32, i32) {
    %c0_i32 = arith.constant 0 : i32
    %c0_i32_0 = arith.constant 0 : i32
    return %arg0, %c0_i32 : i32, i32
  }
  func.func @transform_1(%arg0: i32) -> (i32, i32) {
    %c0_i32 = arith.constant 0 : i32
    %c0_i32_0 = arith.constant 0 : i32
    return %arg0, %c0_i32 : i32, i32
  }
  func.func @transform_2(%arg0: i32) -> (i32, i32) {
    %c0_i32 = arith.constant 0 : i32
    %c0_i32_0 = arith.constant 0 : i32
    return %arg0, %c0_i32 : i32, i32
  }
  func.func @transform_3(%arg0: i32) -> (i32, i32) {
    %c0_i32 = arith.constant 0 : i32
    %c0_i32_0 = arith.constant 0 : i32
    return %arg0, %c0_i32 : i32, i32
  }
  func.func @transform_4(%arg0: i32) -> (i32, i32) {
    %c0_i32 = arith.constant 0 : i32
    %c0_i32_0 = arith.constant 0 : i32
    return %arg0, %c0_i32 : i32, i32
  }
  func.func @transform_5(%arg0: i32) -> (i32, i32, i32) {
    %c0_i32 = arith.constant 0 : i32
    %c0_i32_0 = arith.constant 0 : i32
    %c0_i32_1 = arith.constant 0 : i32
    return %arg0, %c0_i32, %c0_i32_0 : i32, i32, i32
  }
}

</mosaic_0001>

<llo_original>
// kernel: tpu_custom_call.1
$region0: #{tpu_custom_call.1}
  #allocation0 [shape = 'u32[]', space=smem, size = 0x4, offset = 0x4, fixed_abs, tag = 'smem constant byte address 0x4 - core index']
  #allocation1 [shape = 'u32[144,128]{1,0:T(1,128)}', space=vmem, size = 0x12000, scoped, tag = 'internal scratch']
  %s0 = inlined_call_operand.hbm [shape: f32[32,256], index: 0, kind: input, shape index: {}]
  %s1 = inlined_call_operand.hbm [shape: f32[32,256], index: 1, kind: input, shape index: {}]
  %s2 = inlined_call_operand.hbm [shape: f32[32,256], index: 2, kind: input, shape index: {}]
  %s3 = inlined_call_operand.hbm [shape: f32[32,256], index: 3, kind: input, shape index: {}]
  %s4 = inlined_call_operand.vmem [shape: f32[32,1], index: 4, kind: input, shape index: {}]
  %s5 = inlined_call_operand.vmem [shape: f32[2,1,1], index: 5, kind: output, shape index: {}]
  %s6 = sld [smem:[#allocation0]]
  $region69: #{tpu_custom_call.1} parent=0
    _
  %s8 = ssub.s32 1, %s6
  %s9 = scalar_select 0, %s8, %s6
  $region1: #{tpu_custom_call.1} parent=0
    #allocation2 [shape = 'u8[32768]{0}', space=vmem, size = 0x8000, scoped, tag = 'input window, operand 0']
    #allocation3 [shape = 's32[2]{0}', space=sflag, size = 0x8, scoped, tag = 'scoped memory for tpu_custom_call.1']
    #allocation4 [shape = 'u8[32768]{0}', space=vmem, size = 0x8000, scoped, tag = 'input window, operand 1']
    #allocation5 [shape = 's32[2]{0}', space=sflag, size = 0x8, scoped, tag = 'scoped memory for tpu_custom_call.1']
    #allocation6 [shape = 'u8[32768]{0}', space=vmem, size = 0x8000, scoped, tag = 'input window, operand 2']
    #allocation7 [shape = 'u8[32768]{0}', space=vmem, size = 0x8000, scoped, tag = 'input window, operand 3']
    #allocation8 [shape = 's32[2]{0}', space=sflag, size = 0x8, scoped, tag = 'scoped memory for tpu_custom_call.1']
    %10 = vsyncpa [#allocation3], 0
    %s11 = scalar_lea.sflag [#allocation3], 1
    %12 = vsyncpa %s11, 0
    %13 = vsyncpa [#allocation5], 0
    %s14 = scalar_lea.sflag [#allocation5], 1
    %15 = vsyncpa %s14, 0
    %16 = vsyncpa [#allocation8], 0
    %s17 = scalar_lea.sflag [#allocation8], 1
    %18 = vsyncpa %s17, 0
    loop: start=0, step=1, limit=4
    $region2: #{tpu_custom_call.1} parent=1 // loop_pre_header
      _
    $region3: #{tpu_custom_call.1} parent=1 // loop_header
      %s20 = sphi 0, %s24
      %p21 = scmp.ge.s32.totalorder %s20, 4
      %s30 = sphi 0, %s32
      %s33 = sphi 0, %s30
      %s34 = sphi 0, %s33
      %s50 = sphi 0, %s34
      %s56 = sphi 0, %s58
      %s59 = sphi 0, %s56
      %s60 = sphi 0, %s59
      %s76 = sphi 0, %s60
      %s82 = sphi 0, %s84
      %s85 = sphi 0, %s82
      %s86 = sphi 0, %s85
      %s102 = sphi 0, %s86
      %s108 = sphi 0, %s110
      %s111 = sphi 0, %s108
      %s112 = sphi 0, %s111
      %s128 = sphi 0, %s112
      %s134 = sphi 0, %s136
      %s137 = sphi 0, %s134
      %s138 = sphi 0, %s137
      %s154 = sphi 0, %s138
      %s160 = sphi 0, %s162
      %s163 = sphi 0, %s160
      %s164 = sphi 0, %s163
      %s180 = sphi 0, %s164
    $region4: #{tpu_custom_call.1} parent=1 // loop_header_branch
      %23 = sbr.rel (%p21) target = $region8
    $region5: #{tpu_custom_call.1} parent=1 // loop_body
      %s25 = ssub.s32 %s20, 1
      %s26 = ssub.s32 %s20, 2
      %s27 = sadd.s32 %s20, 1
      %s28 = ssub.s32 %s20, %s27
      %p29 = scmp.eq.s32.totalorder %s28, 0
      %s31 = sadd.s32 %s30, 1
      %s32 = scalar_select %p29, %s30, %s31
      %p35 = pneg %p29
      %p36 = scmp.eq.s32.totalorder %s20, 1
      %p37 = por %p35, %p36
      %p38 = scmp.ne.s32.totalorder %s30, %s33
      %p39 = scmp.eq.s32.totalorder %s20, 0
      %p40 = por %p38, %p39
      %p41 = scmp.ne.s32.totalorder %s30, %s33
      %p42 = scmp.eq.s32.totalorder %s25, 1
      %p43 = por %p41, %p42
      %p44 = scmp.ne.s32.totalorder %s33, %s34
      %p45 = scmp.eq.s32.totalorder %s25, 0
      %p46 = por %p44, %p45
      %p47 = scmp.ne.s32.totalorder %s33, %s34
      %p48 = scmp.eq.s32.totalorder %s26, 1
      %p49 = por %p47, %p48
      %p51 = scmp.ne.s32.totalorder %s34, %s50
      %p52 = scmp.eq.s32.totalorder %s26, 0
      %p53 = por %p51, %p52
      %s54 = ssub.s32 %s20, %s27
      %p55 = scmp.eq.s32.totalorder %s54, 0
      %s57 = sadd.s32 %s56, 1
      %s58 = scalar_select %p55, %s56, %s57
      %p61 = pneg %p55
      %p62 = scmp.eq.s32.totalorder %s20, 1
      %p63 = por %p61, %p62
      %p64 = scmp.ne.s32.totalorder %s56, %s59
      %p65 = scmp.eq.s32.totalorder %s20, 0
      %p66 = por %p64, %p65
      %p67 = scmp.ne.s32.totalorder %s56, %s59
      %p68 = scmp.eq.s32.totalorder %s25, 1
      %p69 = por %p67, %p68
      %p70 = scmp.ne.s32.totalorder %s59, %s60
      %p71 = scmp.eq.s32.totalorder %s25, 0
      %p72 = por %p70, %p71
      %p73 = scmp.ne.s32.totalorder %s59, %s60
      %p74 = scmp.eq.s32.totalorder %s26, 1
      %p75 = por %p73, %p74
      %p77 = scmp.ne.s32.totalorder %s60, %s76
      %p78 = scmp.eq.s32.totalorder %s26, 0
      %p79 = por %p77, %p78
      %s80 = ssub.s32 %s20, %s27
      %p81 = scmp.eq.s32.totalorder %s80, 0
      %s83 = sadd.s32 %s82, 1
      %s84 = scalar_select %p81, %s82, %s83
      %p87 = pneg %p81
      %p88 = scmp.eq.s32.totalorder %s20, 1
      %p89 = por %p87, %p88
      %p90 = scmp.ne.s32.totalorder %s82, %s85
      %p91 = scmp.eq.s32.totalorder %s20, 0
      %p92 = por %p90, %p91
      %p93 = scmp.ne.s32.totalorder %s82, %s85
      %p94 = scmp.eq.s32.totalorder %s25, 1
      %p95 = por %p93, %p94
      %p96 = scmp.ne.s32.totalorder %s85, %s86
      %p97 = scmp.eq.s32.totalorder %s25, 0
      %p98 = por %p96, %p97
      %p99 = scmp.ne.s32.totalorder %s85, %s86
      %p100 = scmp.eq.s32.totalorder %s26, 1
      %p101 = por %p99, %p100
      %p103 = scmp.ne.s32.totalorder %s86, %s102
      %p104 = scmp.eq.s32.totalorder %s26, 0
      %p105 = por %p103, %p104
      %s106 = ssub.s32 %s20, %s27
      %p107 = scmp.eq.s32.totalorder %s106, 0
      %s109 = sadd.s32 %s108, 1
      %s110 = scalar_select %p107, %s108, %s109
      %p113 = pneg %p107
      %p114 = scmp.eq.s32.totalorder %s20, 1
      %p115 = por %p113, %p114
      %p116 = scmp.ne.s32.totalorder %s108, %s111
      %p117 = scmp.eq.s32.totalorder %s20, 0
      %p118 = por %p116, %p117
      %p119 = scmp.ne.s32.totalorder %s108, %s111
      %p120 = scmp.eq.s32.totalorder %s25, 1
      %p121 = por %p119, %p120
      %p122 = scmp.ne.s32.totalorder %s111, %s112
      %p123 = scmp.eq.s32.totalorder %s25, 0
      %p124 = por %p122, %p123
      %p125 = scmp.ne.s32.totalorder %s111, %s112
      %p126 = scmp.eq.s32.totalorder %s26, 1
      %p127 = por %p125, %p126
      %p129 = scmp.ne.s32.totalorder %s112, %s128
      %p130 = scmp.eq.s32.totalorder %s26, 0
      %p131 = por %p129, %p130
      %s132 = ssub.s32 %s20, %s27
      %p133 = scmp.eq.s32.totalorder %s132, 0
      %s135 = sadd.s32 %s134, 1
      %s136 = scalar_select %p133, %s134, %s135
      %p139 = pneg %p133
      %p140 = scmp.eq.s32.totalorder %s20, 1
      %p141 = por %p139, %p140
      %p142 = scmp.ne.s32.totalorder %s134, %s137
      %p143 = scmp.eq.s32.totalorder %s20, 0
      %p144 = por %p142, %p143
      %p145 = scmp.ne.s32.totalorder %s134, %s137
      %p146 = scmp.eq.s32.totalorder %s25, 1
      %p147 = por %p145, %p146
      %p148 = scmp.ne.s32.totalorder %s137, %s138
      %p149 = scmp.eq.s32.totalorder %s25, 0
      %p150 = por %p148, %p149
      %p151 = scmp.ne.s32.totalorder %s137, %s138
      %p152 = scmp.eq.s32.totalorder %s26, 1
      %p153 = por %p151, %p152
      %p155 = scmp.ne.s32.totalorder %s138, %s154
      %p156 = scmp.eq.s32.totalorder %s26, 0
      %p157 = por %p155, %p156
      %s158 = ssub.s32 %s20, %s27
      %p159 = scmp.eq.s32.totalorder %s158, 0
      %s161 = sadd.s32 %s160, 1
      %s162 = scalar_select %p159, %s160, %s161
      %p165 = pneg %p159
      %p166 = scmp.eq.s32.totalorder %s20, 1
      %p167 = por %p165, %p166
      %p168 = scmp.ne.s32.totalorder %s160, %s163
      %p169 = scmp.eq.s32.totalorder %s20, 0
      %p170 = por %p168, %p169
      %p171 = scmp.ne.s32.totalorder %s160, %s163
      %p172 = scmp.eq.s32.totalorder %s25, 1
      %p173 = por %p171, %p172
      %p174 = scmp.ne.s32.totalorder %s163, %s164
      %p175 = scmp.eq.s32.totalorder %s25, 0
      %p176 = por %p174, %p175
      %p177 = scmp.ne.s32.totalorder %s163, %s164
      %p178 = scmp.eq.s32.totalorder %s26, 1
      %p179 = por %p177, %p178
      %p181 = scmp.ne.s32.totalorder %s164, %s180
      %p182 = scmp.eq.s32.totalorder %s26, 0
      %p183 = por %p181, %p182
      %p184 = scmp.le.s32.totalorder 1, %s20
      %p185 = scmp.lt.s32.totalorder %s20, 3
      %p186 = pnand %p184, %p185
      %p187 = pneg %p186
      // Predicated region
      $region9: #{tpu_custom_call.1} parent=5 // pred_check
        _
      $region10: #{tpu_custom_call.1} parent=5 // pred_check_branch
        %189 = sbr.rel (%p186) target = $region12
      $region11: #{tpu_custom_call.1} parent=5 // pred_region
        %s190 = ssub.s32 %s20, 1
      $region12: #{tpu_custom_call.1} parent=5 // pred_fallthru
        _
      %p191 = scmp.lt.s32.totalorder %s20, 2
      // Predicated region
      $region13: #{tpu_custom_call.1} parent=5 // pred_check
        %p192 = pneg %p191
      $region14: #{tpu_custom_call.1} parent=5 // pred_check_branch
        %194 = sbr.rel (%p192) target = $region16
      $region15: #{tpu_custom_call.1} parent=5 // pred_region
        // Predicated region
        $region17: #{tpu_custom_call.1} parent=15 // pred_check
          %p195 = pneg %p40
        $region18: #{tpu_custom_call.1} parent=15 // pred_check_branch
          %197 = sbr.rel (%p195) target = $region20
        $region19: #{tpu_custom_call.1} parent=15 // pred_region
          %s198 = sand.u32 %s30, 1
          %s199 = scalar_lea.sflag [#allocation3], %s198
          %s200 = sand.u32 %s30, 1
          %s201 = smul.addr %s200, 32
          %s202 = scalar_lea.vmem [#allocation2], %s201
          %s203 = smul.u32 2, %s20
          %s205 = ssub.s32 512, 512
          %206 = vsyncadd %s199, %s205
          %s207 = smul.addr %s203, 2
          %s208 = smul.addr %s207, 128
          %s209 = scalar_lea.hbm %s0, %s208
          %s210 = sshll.u32 %s202, 4
          %s211 = int_to_ptr.vmem [resolvable:$true] %s210
          %216 = dma.hbm_to_vmem [thread:$0]  %s209, 512, %s211, %s199, 256, 256, 16
        $region20: #{tpu_custom_call.1} parent=15 // pred_fallthru
          _
        // Predicated region
        $region21: #{tpu_custom_call.1} parent=15 // pred_check
          %p217 = pneg %p66
        $region22: #{tpu_custom_call.1} parent=15 // pred_check_branch
          %219 = sbr.rel (%p217) target = $region24
        $region23: #{tpu_custom_call.1} parent=15 // pred_region
          %s220 = sand.u32 %s20, 1
          %s221 = scalar_lea.sflag [#allocation5], %s220
          %s222 = sand.u32 %s56, 1
          %s223 = smul.addr %s222, 32
          %s224 = scalar_lea.vmem [#allocation4], %s223
          %s225 = smul.u32 2, %s20
          %s227 = ssub.s32 512, 512
          %228 = vsyncadd %s221, %s227
          %s229 = smul.addr %s225, 2
          %s230 = smul.addr %s229, 128
          %s231 = scalar_lea.hbm %s1, %s230
          %s232 = sshll.u32 %s224, 4
          %s233 = int_to_ptr.vmem [resolvable:$true] %s232
          %238 = dma.hbm_to_vmem [thread:$0]  %s231, 512, %s233, %s221, 256, 256, 16
        $region24: #{tpu_custom_call.1} parent=15 // pred_fallthru
          _
        // Predicated region
        $region25: #{tpu_custom_call.1} parent=15 // pred_check
          %p239 = pneg %p92
        $region26: #{tpu_custom_call.1} parent=15 // pred_check_branch
          %241 = sbr.rel (%p239) target = $region28
        $region27: #{tpu_custom_call.1} parent=15 // pred_region
          %s242 = sand.u32 %s20, 1
          %s243 = scalar_lea.sflag [#allocation5], %s242
          %s244 = sand.u32 %s82, 1
          %s245 = smul.addr %s244, 32
          %s246 = scalar_lea.vmem [#allocation6], %s245
          %s247 = smul.u32 2, %s20
          %s249 = ssub.s32 512, 512
          %250 = vsyncadd %s243, %s249
          %s251 = smul.addr %s247, 2
          %s252 = smul.addr %s251, 128
          %s253 = scalar_lea.hbm %s2, %s252
          %s254 = sshll.u32 %s246, 4
          %s255 = int_to_ptr.vmem [resolvable:$true] %s254
          %260 = dma.hbm_to_vmem [thread:$0]  %s253, 512, %s255, %s243, 256, 256, 16
        $region28: #{tpu_custom_call.1} parent=15 // pred_fallthru
          _
        // Predicated region
        $region29: #{tpu_custom_call.1} parent=15 // pred_check
          %p261 = pneg %p118
        $region30: #{tpu_custom_call.1} parent=15 // pred_check_branch
          %263 = sbr.rel (%p261) target = $region32
        $region31: #{tpu_custom_call.1} parent=15 // pred_region
          %s264 = sand.u32 %s108, 1
          %s265 = scalar_lea.sflag [#allocation8], %s264
          %s266 = sand.u32 %s108, 1
          %s267 = smul.addr %s266, 32
          %s268 = scalar_lea.vmem [#allocation7], %s267
          %s269 = smul.u32 2, %s20
          %s271 = ssub.s32 512, 512
          %272 = vsyncadd %s265, %s271
          %s273 = smul.addr %s269, 2
          %s274 = smul.addr %s273, 128
          %s275 = scalar_lea.hbm %s3, %s274
          %s276 = sshll.u32 %s268, 4
          %s277 = int_to_ptr.vmem [resolvable:$true] %s276
          %282 = dma.hbm_to_vmem [thread:$0]  %s275, 512, %s277, %s265, 256, 256, 16
        $region32: #{tpu_custom_call.1} parent=15 // pred_fallthru
          _
        // Predicated region
        $region33: #{tpu_custom_call.1} parent=15 // pred_check
          %p283 = pneg %p144
        $region34: #{tpu_custom_call.1} parent=15 // pred_check_branch
          %285 = sbr.rel (%p283) target = $region36
        $region35: #{tpu_custom_call.1} parent=15 // pred_region
          %s286 = smul.u32 2, %s20
          %p287 = scmp.lt.s32.totalorder %s286, 3
          %s288 = scalar_select %p287, %s286, 3
          %s289 = smul.addr %s288, 8
          %s290 = scalar_lea.vmem %s4, %s289
          %s291 = smul.u32 2, %s20
        $region36: #{tpu_custom_call.1} parent=15 // pred_fallthru
          _
      $region16: #{tpu_custom_call.1} parent=5 // pred_fallthru
        _
      %p292 = scmp.le.s32.totalorder 1, %s20
      %p293 = scmp.lt.s32.totalorder %s20, 3
      %p294 = pnand %p292, %p293
      %p295 = pneg %p294
      // Predicated region
      $region37: #{tpu_custom_call.1} parent=5 // pred_check
        _
      $region38: #{tpu_custom_call.1} parent=5 // pred_check_branch
        %297 = sbr.rel (%p294) target = $region40
      $region39: #{tpu_custom_call.1} parent=5 // pred_region
        %s298 = ssub.s32 %s20, 1
        %s299 = sand.u32 %s33, 1
        %s300 = scalar_lea.sflag [#allocation3], %s299
        %s301 = sand.u32 %s33, 1
        %s302 = smul.addr %s301, 32
        %s303 = scalar_lea.vmem [#allocation2], %s302
        // Predicated region
        $region41: #{tpu_custom_call.1} parent=39 // pred_check
          %p304 = pneg %p46
        $region42: #{tpu_custom_call.1} parent=39 // pred_check_branch
          %306 = sbr.rel (%p304) target = $region44
        $region43: #{tpu_custom_call.1} parent=39 // pred_region
          %307 = dma.done %s300, 512
        $region44: #{tpu_custom_call.1} parent=39 // pred_fallthru
          _
        %s308 = sand.u32 %s25, 1
        %s309 = scalar_lea.sflag [#allocation5], %s308
        %s310 = sand.u32 %s59, 1
        %s311 = smul.addr %s310, 32
        %s312 = scalar_lea.vmem [#allocation4], %s311
        // Predicated region
        $region45: #{tpu_custom_call.1} parent=39 // pred_check
          %p313 = pneg %p72
        $region46: #{tpu_custom_call.1} parent=39 // pred_check_branch
          %315 = sbr.rel (%p313) target = $region48
        $region47: #{tpu_custom_call.1} parent=39 // pred_region
          %316 = dma.done %s309, 512
        $region48: #{tpu_custom_call.1} parent=39 // pred_fallthru
          _
        %s317 = sand.u32 %s25, 1
        %s318 = scalar_lea.sflag [#allocation5], %s317
        %s319 = sand.u32 %s85, 1
        %s320 = smul.addr %s319, 32
        %s321 = scalar_lea.vmem [#allocation6], %s320
        // Predicated region
        $region49: #{tpu_custom_call.1} parent=39 // pred_check
          %p322 = pneg %p98
        $region50: #{tpu_custom_call.1} parent=39 // pred_check_branch
          %324 = sbr.rel (%p322) target = $region52
        $region51: #{tpu_custom_call.1} parent=39 // pred_region
          %325 = dma.done %s318, 512
        $region52: #{tpu_custom_call.1} parent=39 // pred_fallthru
          _
        %s326 = sand.u32 %s111, 1
        %s327 = scalar_lea.sflag [#allocation8], %s326
        %s328 = sand.u32 %s111, 1
        %s329 = smul.addr %s328, 32
        %s330 = scalar_lea.vmem [#allocation7], %s329
        // Predicated region
        $region53: #{tpu_custom_call.1} parent=39 // pred_check
          %p331 = pneg %p124
        $region54: #{tpu_custom_call.1} parent=39 // pred_check_branch
          %333 = sbr.rel (%p331) target = $region56
        $region55: #{tpu_custom_call.1} parent=39 // pred_region
          %334 = dma.done %s327, 512
        $region56: #{tpu_custom_call.1} parent=39 // pred_fallthru
          _
        %s335 = sand.u32 %s33, 1
        %s336 = scalar_lea.sflag [#allocation3], %s335
        %s337 = sand.u32 %s33, 1
        %s338 = smul.addr %s337, 32
        %s339 = scalar_lea.vmem [#allocation2], %s338
        %p340 = pneg %p46
        %p341 = pneg %p43
        %s342 = sand.u32 %s25, 1
        %s343 = scalar_lea.sflag [#allocation5], %s342
        %s344 = sand.u32 %s59, 1
        %s345 = smul.addr %s344, 32
        %s346 = scalar_lea.vmem [#allocation4], %s345
        %p347 = pneg %p72
        %p348 = pneg %p69
        %s349 = sand.u32 %s25, 1
        %s350 = scalar_lea.sflag [#allocation5], %s349
        %s351 = sand.u32 %s85, 1
        %s352 = smul.addr %s351, 32
        %s353 = scalar_lea.vmem [#allocation6], %s352
        %p354 = pneg %p98
        %p355 = pneg %p95
        %s356 = sand.u32 %s111, 1
        %s357 = scalar_lea.sflag [#allocation8], %s356
        %s358 = sand.u32 %s111, 1
        %s359 = smul.addr %s358, 32
        %s360 = scalar_lea.vmem [#allocation7], %s359
        %p361 = pneg %p124
        %p362 = pneg %p121
        %s363 = smul.u32 2, %s25
        %p364 = scmp.lt.s32.totalorder %s363, 3
        %s365 = scalar_select %p364, %s363, 3
        %s366 = smul.addr %s365, 8
        %s367 = scalar_lea.vmem %s4, %s366
        %p368 = pneg %p150
        %p369 = pneg %p147
        %p370 = pneg %p176
        %p371 = pneg %p173
        %p372 = scmp.lt.s32.totalorder %s25, 1
        %s373 = scalar_select %p372, %s25, 1
        %s374 = scalar_lea.vmem %s5, %s373
        %s375 = smul.u32 2, %s25
        %s376 = smul.u32 2, %s25
        %s377 = smul.u32 2, %s25
        %s378 = smul.u32 2, %s25
        %s379 = smul.u32 2, %s25
        %p380 = scmp.lt.s32.totalorder %s379, 3
        %s381 = scalar_select %p380, %s379, 3
        %s382 = smul.addr %s381, 8
        %s383 = scalar_lea.vmem %s4, %s382
        %s384 = smul.u32 2, %s25
        %p385 = scmp.lt.s32.totalorder %s25, 1
        %s386 = scalar_select %p385, %s25, 1
        %s387 = scalar_lea.vmem %s5, %s386
        %v388 = vld [vmem:[%s303] sm:$0xff]
        %v389 = vld [vmem:[%s303 + $0x8] sm:$0xff]
        %v390 = vld [vmem:[%s303 + $0x10] sm:$0xff]
        %v391 = vld [vmem:[%s303 + $0x18] sm:$0xff]
        %v392 = vld [vmem:[%s312] sm:$0xff]
        %v393 = vld [vmem:[%s312 + $0x8] sm:$0xff]
        %v394 = vld [vmem:[%s312 + $0x10] sm:$0xff]
        %v395 = vld [vmem:[%s312 + $0x18] sm:$0xff]
        %v396 = vld [vmem:[%s321] sm:$0xff]
        %v397 = vld [vmem:[%s321 + $0x8] sm:$0xff]
        %v398 = vld [vmem:[%s321 + $0x10] sm:$0xff]
        %v399 = vld [vmem:[%s321 + $0x18] sm:$0xff]
        %v400 = vld [vmem:[%s330] sm:$0xff]
        %v401 = vld [vmem:[%s330 + $0x8] sm:$0xff]
        %v402 = vld [vmem:[%s330 + $0x10] sm:$0xff]
        %v403 = vld [vmem:[%s330 + $0x18] sm:$0xff]
        %v404 = vld [vmem:[%s383] sm:$0xff]
        %v405 = vld [vmem:[%s383 + $0x8] sm:$0xff]
        %407 = vset.pattern.permute.xlu0 0
        %408 = vperm.xlu0 %407, %v404
        %v409 = vpop.permute.xlu0 %408
        %412 = vset.pattern.permute.xlu0 0
        %413 = vperm.xlu0 %412, %v405
        %v414 = vpop.permute.xlu0 %413
        %v416 = vmul.f32 %v392, %v409
        %v417 = vmul.f32 %v393, %v409
        %v418 = vmul.f32 %v394, %v414
        %v419 = vmul.f32 %v395, %v414
        %v420 = vadd.f32 %v396, 1e-10
        %v421 = vadd.f32 %v397, 1e-10
        %v422 = vadd.f32 %v398, 1e-10
        %v423 = vadd.f32 %v399, 1e-10
        %v424 = vlog2.pop %v420
        %v425 = vmul.f32 %v424, 0.6931472
        %v426 = vlog2.pop %v421
        %v427 = vmul.f32 %v426, 0.6931472
        %v428 = vlog2.pop %v422
        %v429 = vmul.f32 %v428, 0.6931472
        %v430 = vlog2.pop %v423
        %v431 = vmul.f32 %v430, 0.6931472
        %v432 = vadd.f32 %v416, 1e-10
        %v433 = vadd.f32 %v417, 1e-10
        %v434 = vadd.f32 %v418, 1e-10
        %v435 = vadd.f32 %v419, 1e-10
        %v436 = vlog2.pop %v432
        %v437 = vmul.f32 %v436, 0.6931472
        %v438 = vlog2.pop %v433
        %v439 = vmul.f32 %v438, 0.6931472
        %v440 = vlog2.pop %v434
        %v441 = vmul.f32 %v440, 0.6931472
        %v442 = vlog2.pop %v435
        %v443 = vmul.f32 %v442, 0.6931472
        %v444 = vadd.f32 %v396, %v416
        %v445 = vadd.f32 %v397, %v417
        %v446 = vadd.f32 %v398, %v418
        %v447 = vadd.f32 %v399, %v419
        %v448 = vadd.f32 %v444, 1e-10
        %v449 = vadd.f32 %v445, 1e-10
        %v450 = vadd.f32 %v446, 1e-10
        %v451 = vadd.f32 %v447, 1e-10
        %v452 = vlog2.pop %v448
        %v453 = vmul.f32 %v452, 0.6931472
        %v454 = vlog2.pop %v449
        %v455 = vmul.f32 %v454, 0.6931472
        %v456 = vlog2.pop %v450
        %v457 = vmul.f32 %v456, 0.6931472
        %v458 = vlog2.pop %v451
        %v459 = vmul.f32 %v458, 0.6931472
        %v460 = vadd.f32 %v420, 1.0
        %v461 = vadd.f32 %v421, 1.0
        %v462 = vadd.f32 %v422, 1.0
        %v463 = vadd.f32 %v423, 1.0
        %v464 = vmul.f32 %v420, %v460
        %v465 = vmul.f32 %v421, %v461
        %v466 = vmul.f32 %v422, %v462
        %v467 = vmul.f32 %v423, %v463
        %v468 = vadd.f32 %v420, 2.0
        %v469 = vadd.f32 %v421, 2.0
        %v470 = vadd.f32 %v422, 2.0
        %v471 = vadd.f32 %v423, 2.0
        %v472 = vmul.f32 %v464, %v468
        %v473 = vmul.f32 %v465, %v469
        %v474 = vmul.f32 %v466, %v470
        %v475 = vmul.f32 %v467, %v471
        %v476 = vadd.f32 %v420, 3.0
        %v477 = vadd.f32 %v421, 3.0
        %v478 = vadd.f32 %v422, 3.0
        %v479 = vadd.f32 %v423, 3.0
        %v480 = vmul.f32 %v472, %v476
        %v481 = vmul.f32 %v473, %v477
        %v482 = vmul.f32 %v474, %v478
        %v483 = vmul.f32 %v475, %v479
        %v484 = vadd.f32 %v420, 4.0
        %v485 = vadd.f32 %v421, 4.0
        %v486 = vadd.f32 %v422, 4.0
        %v487 = vadd.f32 %v423, 4.0
        %v488 = vmul.f32 %v480, %v484
        %v489 = vmul.f32 %v481, %v485
        %v490 = vmul.f32 %v482, %v486
        %v491 = vmul.f32 %v483, %v487
        %v492 = vadd.f32 %v420, 5.0
        %v493 = vadd.f32 %v421, 5.0
        %v494 = vadd.f32 %v422, 5.0
        %v495 = vadd.f32 %v423, 5.0
        %v496 = vrcp.pop %v492
        %v497 = vrcp.pop %v493
        %v498 = vrcp.pop %v494
        %v499 = vrcp.pop %v495
        %v500 = vmul.f32 %v492, %v496
        %v501 = vmul.f32 %v493, %v497
        %v502 = vmul.f32 %v494, %v498
        %v503 = vmul.f32 %v495, %v499
        %v504 = vsub.f32 2.0, %v500
        %v505 = vsub.f32 2.0, %v501
        %v506 = vsub.f32 2.0, %v502
        %v507 = vsub.f32 2.0, %v503
        %v508 = vmul.f32 %v496, %v504
        %v509 = vmul.f32 %v497, %v505
        %v510 = vmul.f32 %v498, %v506
        %v511 = vmul.f32 %v499, %v507
        %v512 = vmul.f32 %v508, %v508
        %v513 = vmul.f32 %v509, %v509
        %v514 = vmul.f32 %v510, %v510
        %v515 = vmul.f32 %v511, %v511
        %v516 = vmul.f32 %v512, 0.0007936508
        %v517 = vmul.f32 %v513, 0.0007936508
        %v518 = vmul.f32 %v514, 0.0007936508
        %v519 = vmul.f32 %v515, 0.0007936508
        %v520 = vsub.f32 0.0027777778, %v516
        %v521 = vsub.f32 0.0027777778, %v517
        %v522 = vsub.f32 0.0027777778, %v518
        %v523 = vsub.f32 0.0027777778, %v519
        %v524 = vmul.f32 %v512, %v520
        %v525 = vmul.f32 %v513, %v521
        %v526 = vmul.f32 %v514, %v522
        %v527 = vmul.f32 %v515, %v523
        %v528 = vsub.f32 0.083333336, %v524
        %v529 = vsub.f32 0.083333336, %v525
        %v530 = vsub.f32 0.083333336, %v526
        %v531 = vsub.f32 0.083333336, %v527
        %v532 = vmul.f32 %v508, %v528
        %v533 = vmul.f32 %v509, %v529
        %v534 = vmul.f32 %v510, %v530
        %v535 = vmul.f32 %v511, %v531
        %v536 = vsub.f32 %v492, 0.5
        %v537 = vsub.f32 %v493, 0.5
        %v538 = vsub.f32 %v494, 0.5
        %v539 = vsub.f32 %v495, 0.5
        %v540 = vlog2.pop %v492
        %v541 = vmul.f32 %v540, 0.6931472
        %v542 = vlog2.pop %v493
        %v543 = vmul.f32 %v542, 0.6931472
        %v544 = vlog2.pop %v494
        %v545 = vmul.f32 %v544, 0.6931472
        %v546 = vlog2.pop %v495
        %v547 = vmul.f32 %v546, 0.6931472
        %v548 = vmul.f32 %v536, %v541
        %v549 = vmul.f32 %v537, %v543
        %v550 = vmul.f32 %v538, %v545
        %v551 = vmul.f32 %v539, %v547
        %v552 = vsub.f32 %v548, %v492
        %v553 = vsub.f32 %v549, %v493
        %v554 = vsub.f32 %v550, %v494
        %v555 = vsub.f32 %v551, %v495
        %v556 = vadd.f32 %v552, 0.9189385
        %v557 = vadd.f32 %v553, 0.9189385
        %v558 = vadd.f32 %v554, 0.9189385
        %v559 = vadd.f32 %v555, 0.9189385
        %v560 = vadd.f32 %v556, %v532
        %v561 = vadd.f32 %v557, %v533
        %v562 = vadd.f32 %v558, %v534
        %v563 = vadd.f32 %v559, %v535
        %v564 = vlog2.pop %v488
        %v565 = vmul.f32 %v564, 0.6931472
        %v566 = vlog2.pop %v489
        %v567 = vmul.f32 %v566, 0.6931472
        %v568 = vlog2.pop %v490
        %v569 = vmul.f32 %v568, 0.6931472
        %v570 = vlog2.pop %v491
        %v571 = vmul.f32 %v570, 0.6931472
        %v572 = vsub.f32 %v560, %v565
        %v573 = vsub.f32 %v561, %v567
        %v574 = vsub.f32 %v562, %v569
        %v575 = vsub.f32 %v563, %v571
        %v576 = vadd.f32 %v388, 1.0
        %v577 = vadd.f32 %v389, 1.0
        %v578 = vadd.f32 %v390, 1.0
        %v579 = vadd.f32 %v391, 1.0
        %v580 = vadd.f32 %v576, 1.0
        %v581 = vadd.f32 %v577, 1.0
        %v582 = vadd.f32 %v578, 1.0
        %v583 = vadd.f32 %v579, 1.0
        %v584 = vmul.f32 %v576, %v580
        %v585 = vmul.f32 %v577, %v581
        %v586 = vmul.f32 %v578, %v582
        %v587 = vmul.f32 %v579, %v583
        %v588 = vadd.f32 %v576, 2.0
        %v589 = vadd.f32 %v577, 2.0
        %v590 = vadd.f32 %v578, 2.0
        %v591 = vadd.f32 %v579, 2.0
        %v592 = vmul.f32 %v584, %v588
        %v593 = vmul.f32 %v585, %v589
        %v594 = vmul.f32 %v586, %v590
        %v595 = vmul.f32 %v587, %v591
        %v596 = vadd.f32 %v576, 3.0
        %v597 = vadd.f32 %v577, 3.0
        %v598 = vadd.f32 %v578, 3.0
        %v599 = vadd.f32 %v579, 3.0
        %v600 = vmul.f32 %v592, %v596
        %v601 = vmul.f32 %v593, %v597
        %v602 = vmul.f32 %v594, %v598
        %v603 = vmul.f32 %v595, %v599
        %v604 = vadd.f32 %v576, 4.0
        %v605 = vadd.f32 %v577, 4.0
        %v606 = vadd.f32 %v578, 4.0
        %v607 = vadd.f32 %v579, 4.0
        %v608 = vmul.f32 %v600, %v604
        %v609 = vmul.f32 %v601, %v605
        %v610 = vmul.f32 %v602, %v606
        %v611 = vmul.f32 %v603, %v607
        %v612 = vadd.f32 %v576, 5.0
        %v613 = vadd.f32 %v577, 5.0
        %v614 = vadd.f32 %v578, 5.0
        %v615 = vadd.f32 %v579, 5.0
        %v616 = vrcp.pop %v612
        %v617 = vrcp.pop %v613
        %v618 = vrcp.pop %v614
        %v619 = vrcp.pop %v615
        %v620 = vmul.f32 %v612, %v616
        %v621 = vmul.f32 %v613, %v617
        %v622 = vmul.f32 %v614, %v618
        %v623 = vmul.f32 %v615, %v619
        %v624 = vsub.f32 2.0, %v620
        %v625 = vsub.f32 2.0, %v621
        %v626 = vsub.f32 2.0, %v622
        %v627 = vsub.f32 2.0, %v623
        %v628 = vmul.f32 %v616, %v624
        %v629 = vmul.f32 %v617, %v625
        %v630 = vmul.f32 %v618, %v626
        %v631 = vmul.f32 %v619, %v627
        %v632 = vmul.f32 %v628, %v628
        %v633 = vmul.f32 %v629, %v629
        %v634 = vmul.f32 %v630, %v630
        %v635 = vmul.f32 %v631, %v631
        %v636 = vmul.f32 %v632, 0.0007936508
        %v637 = vmul.f32 %v633, 0.0007936508
        %v638 = vmul.f32 %v634, 0.0007936508
        %v639 = vmul.f32 %v635, 0.0007936508
        %v640 = vsub.f32 0.0027777778, %v636
        %v641 = vsub.f32 0.0027777778, %v637
        %v642 = vsub.f32 0.0027777778, %v638
        %v643 = vsub.f32 0.0027777778, %v639
        %v644 = vmul.f32 %v632, %v640
        %v645 = vmul.f32 %v633, %v641
        %v646 = vmul.f32 %v634, %v642
        %v647 = vmul.f32 %v635, %v643
        %v648 = vsub.f32 0.083333336, %v644
        %v649 = vsub.f32 0.083333336, %v645
        %v650 = vsub.f32 0.083333336, %v646
        %v651 = vsub.f32 0.083333336, %v647
        %v652 = vmul.f32 %v628, %v648
        %v653 = vmul.f32 %v629, %v649
        %v654 = vmul.f32 %v630, %v650
        %v655 = vmul.f32 %v631, %v651
        %v656 = vsub.f32 %v612, 0.5
        %v657 = vsub.f32 %v613, 0.5
        %v658 = vsub.f32 %v614, 0.5
        %v659 = vsub.f32 %v615, 0.5
        %v660 = vlog2.pop %v612
        %v661 = vmul.f32 %v660, 0.6931472
        %v662 = vlog2.pop %v613
        %v663 = vmul.f32 %v662, 0.6931472
        %v664 = vlog2.pop %v614
        %v665 = vmul.f32 %v664, 0.6931472
        %v666 = vlog2.pop %v615
        %v667 = vmul.f32 %v666, 0.6931472
        %v668 = vmul.f32 %v656, %v661
        %v669 = vmul.f32 %v657, %v663
        %v670 = vmul.f32 %v658, %v665
        %v671 = vmul.f32 %v659, %v667
        %v672 = vsub.f32 %v668, %v612
        %v673 = vsub.f32 %v669, %v613
        %v674 = vsub.f32 %v670, %v614
        %v675 = vsub.f32 %v671, %v615
        %v676 = vadd.f32 %v672, 0.9189385
        %v677 = vadd.f32 %v673, 0.9189385
        %v678 = vadd.f32 %v674, 0.9189385
        %v679 = vadd.f32 %v675, 0.9189385
        %v680 = vadd.f32 %v676, %v652
        %v681 = vadd.f32 %v677, %v653
        %v682 = vadd.f32 %v678, %v654
        %v683 = vadd.f32 %v679, %v655
        %v684 = vlog2.pop %v608
        %v685 = vmul.f32 %v684, 0.6931472
        %v686 = vlog2.pop %v609
        %v687 = vmul.f32 %v686, 0.6931472
        %v688 = vlog2.pop %v610
        %v689 = vmul.f32 %v688, 0.6931472
        %v690 = vlog2.pop %v611
        %v691 = vmul.f32 %v690, 0.6931472
        %v692 = vsub.f32 %v680, %v685
        %v693 = vsub.f32 %v681, %v687
        %v694 = vsub.f32 %v682, %v689
        %v695 = vsub.f32 %v683, %v691
        %v696 = vadd.f32 %v572, %v692
        %v697 = vadd.f32 %v573, %v693
        %v698 = vadd.f32 %v574, %v694
        %v699 = vadd.f32 %v575, %v695
        %v700 = vadd.f32 %v388, %v396
        %v701 = vadd.f32 %v389, %v397
        %v702 = vadd.f32 %v390, %v398
        %v703 = vadd.f32 %v391, %v399
        %v704 = vadd.f32 %v700, 1e-10
        %v705 = vadd.f32 %v701, 1e-10
        %v706 = vadd.f32 %v702, 1e-10
        %v707 = vadd.f32 %v703, 1e-10
        %v708 = vadd.f32 %v704, 1.0
        %v709 = vadd.f32 %v705, 1.0
        %v710 = vadd.f32 %v706, 1.0
        %v711 = vadd.f32 %v707, 1.0
        %v712 = vmul.f32 %v704, %v708
        %v713 = vmul.f32 %v705, %v709
        %v714 = vmul.f32 %v706, %v710
        %v715 = vmul.f32 %v707, %v711
        %v716 = vadd.f32 %v704, 2.0
        %v717 = vadd.f32 %v705, 2.0
        %v718 = vadd.f32 %v706, 2.0
        %v719 = vadd.f32 %v707, 2.0
        %v720 = vmul.f32 %v712, %v716
        %v721 = vmul.f32 %v713, %v717
        %v722 = vmul.f32 %v714, %v718
        %v723 = vmul.f32 %v715, %v719
        %v724 = vadd.f32 %v704, 3.0
        %v725 = vadd.f32 %v705, 3.0
        %v726 = vadd.f32 %v706, 3.0
        %v727 = vadd.f32 %v707, 3.0
        %v728 = vmul.f32 %v720, %v724
        %v729 = vmul.f32 %v721, %v725
        %v730 = vmul.f32 %v722, %v726
        %v731 = vmul.f32 %v723, %v727
        %v732 = vadd.f32 %v704, 4.0
        %v733 = vadd.f32 %v705, 4.0
        %v734 = vadd.f32 %v706, 4.0
        %v735 = vadd.f32 %v707, 4.0
        %v736 = vmul.f32 %v728, %v732
        %v737 = vmul.f32 %v729, %v733
        %v738 = vmul.f32 %v730, %v734
        %v739 = vmul.f32 %v731, %v735
        %v740 = vadd.f32 %v704, 5.0
        %v741 = vadd.f32 %v705, 5.0
        %v742 = vadd.f32 %v706, 5.0
        %v743 = vadd.f32 %v707, 5.0
        %v744 = vrcp.pop %v740
        %v745 = vrcp.pop %v741
        %v746 = vrcp.pop %v742
        %v747 = vrcp.pop %v743
        %v748 = vmul.f32 %v740, %v744
        %v749 = vmul.f32 %v741, %v745
        %v750 = vmul.f32 %v742, %v746
        %v751 = vmul.f32 %v743, %v747
        %v752 = vsub.f32 2.0, %v748
        %v753 = vsub.f32 2.0, %v749
        %v754 = vsub.f32 2.0, %v750
        %v755 = vsub.f32 2.0, %v751
        %v756 = vmul.f32 %v744, %v752
        %v757 = vmul.f32 %v745, %v753
        %v758 = vmul.f32 %v746, %v754
        %v759 = vmul.f32 %v747, %v755
        %v760 = vmul.f32 %v756, %v756
        %v761 = vmul.f32 %v757, %v757
        %v762 = vmul.f32 %v758, %v758
        %v763 = vmul.f32 %v759, %v759
        %v764 = vmul.f32 %v760, 0.0007936508
        %v765 = vmul.f32 %v761, 0.0007936508
        %v766 = vmul.f32 %v762, 0.0007936508
        %v767 = vmul.f32 %v763, 0.0007936508
        %v768 = vsub.f32 0.0027777778, %v764
        %v769 = vsub.f32 0.0027777778, %v765
        %v770 = vsub.f32 0.0027777778, %v766
        %v771 = vsub.f32 0.0027777778, %v767
        %v772 = vmul.f32 %v760, %v768
        %v773 = vmul.f32 %v761, %v769
        %v774 = vmul.f32 %v762, %v770
        %v775 = vmul.f32 %v763, %v771
        %v776 = vsub.f32 0.083333336, %v772
        %v777 = vsub.f32 0.083333336, %v773
        %v778 = vsub.f32 0.083333336, %v774
        %v779 = vsub.f32 0.083333336, %v775
        %v780 = vmul.f32 %v756, %v776
        %v781 = vmul.f32 %v757, %v777
        %v782 = vmul.f32 %v758, %v778
        %v783 = vmul.f32 %v759, %v779
        %v784 = vsub.f32 %v740, 0.5
        %v785 = vsub.f32 %v741, 0.5
        %v786 = vsub.f32 %v742, 0.5
        %v787 = vsub.f32 %v743, 0.5
        %v788 = vlog2.pop %v740
        %v789 = vmul.f32 %v788, 0.6931472
        %v790 = vlog2.pop %v741
        %v791 = vmul.f32 %v790, 0.6931472
        %v792 = vlog2.pop %v742
        %v793 = vmul.f32 %v792, 0.6931472
        %v794 = vlog2.pop %v743
        %v795 = vmul.f32 %v794, 0.6931472
        %v796 = vmul.f32 %v784, %v789
        %v797 = vmul.f32 %v785, %v791
        %v798 = vmul.f32 %v786, %v793
        %v799 = vmul.f32 %v787, %v795
        %v800 = vsub.f32 %v796, %v740
        %v801 = vsub.f32 %v797, %v741
        %v802 = vsub.f32 %v798, %v742
        %v803 = vsub.f32 %v799, %v743
        %v804 = vadd.f32 %v800, 0.9189385
        %v805 = vadd.f32 %v801, 0.9189385
        %v806 = vadd.f32 %v802, 0.9189385
        %v807 = vadd.f32 %v803, 0.9189385
        %v808 = vadd.f32 %v804, %v780
        %v809 = vadd.f32 %v805, %v781
        %v810 = vadd.f32 %v806, %v782
        %v811 = vadd.f32 %v807, %v783
        %v812 = vlog2.pop %v736
        %v813 = vmul.f32 %v812, 0.6931472
        %v814 = vlog2.pop %v737
        %v815 = vmul.f32 %v814, 0.6931472
        %v816 = vlog2.pop %v738
        %v817 = vmul.f32 %v816, 0.6931472
        %v818 = vlog2.pop %v739
        %v819 = vmul.f32 %v818, 0.6931472
        %v820 = vsub.f32 %v808, %v813
        %v821 = vsub.f32 %v809, %v815
        %v822 = vsub.f32 %v810, %v817
        %v823 = vsub.f32 %v811, %v819
        %v824 = vsub.f32 %v696, %v820
        %v825 = vsub.f32 %v697, %v821
        %v826 = vsub.f32 %v698, %v822
        %v827 = vsub.f32 %v699, %v823
        %v828 = vsub.f32 %v453, %v425
        %v829 = vsub.f32 %v455, %v427
        %v830 = vsub.f32 %v457, %v429
        %v831 = vsub.f32 %v459, %v431
        %v832 = vmul.f32 %v700, %v828
        %v833 = vmul.f32 %v701, %v829
        %v834 = vmul.f32 %v702, %v830
        %v835 = vmul.f32 %v703, %v831
        %v836 = vsub.f32 %v425, %v437
        %v837 = vsub.f32 %v427, %v439
        %v838 = vsub.f32 %v429, %v441
        %v839 = vsub.f32 %v431, %v443
        %v840 = vmul.f32 %v388, %v836
        %v841 = vmul.f32 %v389, %v837
        %v842 = vmul.f32 %v390, %v838
        %v843 = vmul.f32 %v391, %v839
        %v844 = vadd.f32 %v832, %v840
        %v845 = vadd.f32 %v833, %v841
        %v846 = vadd.f32 %v834, %v842
        %v847 = vadd.f32 %v835, %v843
        %v848 = vadd.f32 %v824, %v844
        %v849 = vadd.f32 %v825, %v845
        %v850 = vadd.f32 %v826, %v846
        %v851 = vadd.f32 %v827, %v847
        %v852 = vsub.f32 1.0, %v400
        %v853 = vsub.f32 1.0, %v401
        %v854 = vsub.f32 1.0, %v402
        %v855 = vsub.f32 1.0, %v403
        %v856 = vadd.f32 %v852, 1e-10
        %v857 = vadd.f32 %v853, 1e-10
        %v858 = vadd.f32 %v854, 1e-10
        %v859 = vadd.f32 %v855, 1e-10
        %v860 = vlog2.pop %v856
        %v861 = vmul.f32 %v860, 0.6931472
        %v862 = vlog2.pop %v857
        %v863 = vmul.f32 %v862, 0.6931472
        %v864 = vlog2.pop %v858
        %v865 = vmul.f32 %v864, 0.6931472
        %v866 = vlog2.pop %v859
        %v867 = vmul.f32 %v866, 0.6931472
        %v868 = vsub.f32 %v848, %v861
        %v869 = vsub.f32 %v849, %v863
        %v870 = vsub.f32 %v850, %v865
        %v871 = vsub.f32 %v851, %v867
        %v872 = vsub.f32 %v425, %v453
        %v873 = vsub.f32 %v427, %v455
        %v874 = vsub.f32 %v429, %v457
        %v875 = vsub.f32 %v431, %v459
        %v876 = vmul.f32 %v396, %v872
        %v877 = vmul.f32 %v397, %v873
        %v878 = vmul.f32 %v398, %v874
        %v879 = vmul.f32 %v399, %v875
        %v880 = vmul.f32 %v876, 1.442695
        %v881 = vpow.pop %v880
        %v882 = vmul.f32 %v877, 1.442695
        %v883 = vpow.pop %v882
        %v884 = vmul.f32 %v878, 1.442695
        %v885 = vpow.pop %v884
        %v886 = vmul.f32 %v879, 1.442695
        %v887 = vpow.pop %v886
        %v888 = vmul.f32 %v852, %v881
        %v889 = vmul.f32 %v853, %v883
        %v890 = vmul.f32 %v854, %v885
        %v891 = vmul.f32 %v855, %v887
        %v892 = vadd.f32 %v400, %v888
        %v893 = vadd.f32 %v401, %v889
        %v894 = vadd.f32 %v402, %v890
        %v895 = vadd.f32 %v403, %v891
        %v896 = vadd.f32 %v892, 1e-10
        %v897 = vadd.f32 %v893, 1e-10
        %v898 = vadd.f32 %v894, 1e-10
        %v899 = vadd.f32 %v895, 1e-10
        %v900 = vlog2.pop %v896
        %v901 = vmul.f32 %v900, 0.6931472
        %v902 = vlog2.pop %v897
        %v903 = vmul.f32 %v902, 0.6931472
        %v904 = vlog2.pop %v898
        %v905 = vmul.f32 %v904, 0.6931472
        %v906 = vlog2.pop %v899
        %v907 = vmul.f32 %v906, 0.6931472
        %v908 = vsub.f32 0.0, %v901
        %v909 = vsub.f32 0.0, %v903
        %v910 = vsub.f32 0.0, %v905
        %v911 = vsub.f32 0.0, %v907
        %vm912 = vcmp.le.f32.partialorder %v388, 1e-08
        %vm913 = vcmp.le.f32.partialorder %v389, 1e-08
        %vm914 = vcmp.le.f32.partialorder %v390, 1e-08
        %vm915 = vcmp.le.f32.partialorder %v391, 1e-08
        %v916 = vsel %vm912, %v908, %v868
        %v917 = vsel %vm913, %v909, %v869
        %v918 = vsel %vm914, %v910, %v870
        %v919 = vsel %vm915, %v911, %v871
        %v920 = vadd.f32 %v916, %v917
        %921 = vadd.xlane.f32.xlu0 %v920
        %v922 = vpop.xlane.xlu0 %921
        %v923 = vadd.f32 %v918, %v919
        %924 = vadd.xlane.f32.xlu0 %v923
        %v925 = vpop.xlane.xlu0 %924
        %vm926 = vcmask 7168
        %v927 = vsel %vm926, %v922, 0.0
        %v928 = vsel %vm926, %v925, 0.0
        %v929 = vadd.f32 %v927, %v928
        %930 = vadd.xlane.f32.xlu0 %v929
        %v931 = vpop.xlane.xlu0 %930
        %v932 = vrot.slane %v931, 4
        %v933 = vadd.f32 %v931, %v932
        %v934 = vrot.slane %v933, 2
        %v935 = vadd.f32 %v933, %v934
        %v936 = vrot.slane %v935, 1
        %v937 = vadd.f32 %v935, %v936
        %s938 = vtos %v937
        %v939 = vstv %s938
        %v940 = vadd.f32 %v939, 0.0
        %vm941 = vcmask 0
        %942 = vst.msk [vmem:[%s387] sm:$0x1] %vm941, %v940
        %p943 = scmp.lt.s32.totalorder %s25, 1
        %s944 = scalar_select %p943, %s25, 1
        %s945 = scalar_lea.vmem %s5, %s944
        // Predicated region
        $region57: #{tpu_custom_call.1} parent=39 // pred_check
          %p946 = pneg %p173
        $region58: #{tpu_custom_call.1} parent=39 // pred_check_branch
          %948 = sbr.rel (%p946) target = $region60
        $region59: #{tpu_custom_call.1} parent=39 // pred_region
          _
        $region60: #{tpu_custom_call.1} parent=39 // pred_fallthru
          _
      $region40: #{tpu_custom_call.1} parent=5 // pred_fallthru
        _
      %p949 = scmp.le.s32.totalorder 2, %s20
      // Predicated region
      $region61: #{tpu_custom_call.1} parent=5 // pred_check
        %p950 = pneg %p949
      $region62: #{tpu_custom_call.1} parent=5 // pred_check_branch
        %952 = sbr.rel (%p950) target = $region64
      $region63: #{tpu_custom_call.1} parent=5 // pred_region
        %s953 = ssub.s32 %s20, 2
        // Predicated region
        $region65: #{tpu_custom_call.1} parent=63 // pred_check
          %p954 = pneg %p179
        $region66: #{tpu_custom_call.1} parent=63 // pred_check_branch
          %956 = sbr.rel (%p954) target = $region68
        $region67: #{tpu_custom_call.1} parent=63 // pred_region
          %p957 = scmp.lt.s32.totalorder %s26, 1
          %s958 = scalar_select %p957, %s26, 1
          %s959 = scalar_lea.vmem %s5, %s958
        $region68: #{tpu_custom_call.1} parent=63 // pred_fallthru
          _
      $region64: #{tpu_custom_call.1} parent=5 // pred_fallthru
        _
    $region6: #{tpu_custom_call.1} parent=1 // loop_footer
      %s24 = sadd.s32 1, %s20
    $region7: #{tpu_custom_call.1} parent=1 // loop_footer_branch
      %19 = sbr.rel target = $region3
    $region8: #{tpu_custom_call.1} parent=1 // loop_exit
      _
    %960 = vsyncpa [#allocation3], 1
    %s961 = scalar_lea.sflag [#allocation3], 1
    %962 = vsyncpa %s961, 1
    %963 = vsyncpa [#allocation5], 1
    %s964 = scalar_lea.sflag [#allocation5], 1
    %965 = vsyncpa %s964, 1
    %966 = vsyncpa [#allocation8], 1
    %s967 = scalar_lea.sflag [#allocation8], 1
    %968 = vsyncpa %s967, 1

</llo_original>
